<compile_context>
chip_gen: v5e
topology: v5e:2x2
jax: 0.10.0
libtpu: 0.0.40
codegen_flags: <defaults>
</compile_context>

<pallas_src>
import jax
import jax.numpy as jnp
from jax.experimental import pallas as pl
from jax.experimental.pallas import tpu as pltpu


def _group_kernel(x_ref, w1_ref, b1_ref, alpha_ref, w2_ref, b2_ref, th_ref, o_ref):
    # One grid step == Bt batch elements.
    x = x_ref[...]                       # (Bt, N, D) f32
    D = x.shape[-1]
    H1 = w1_ref.shape[-1]

    # ---- Linear(D -> 8): D is tiny, unroll as VPU broadcast-FMAs (skip MXU).
    h = x[..., 0:1] * w1_ref[0:1, :]
    for d in range(1, D):
        h = h + x[..., d:d + 1] * w1_ref[d:d + 1, :]
    h = h + b1_ref[...]                  # (Bt, N, H1)

    # ---- PReLU (single shared slope, scalar read from SMEM).
    alpha = alpha_ref[0]
    h = jnp.where(h >= 0.0, h, alpha * h)

    # ---- Linear(8 -> 16): K=8 still << MXU width, unroll on the VPU as well.
    y = h[..., 0:1] * w2_ref[0:1, :]
    for k in range(1, H1):
        y = y + h[..., k:k + 1] * w2_ref[k:k + 1, :]
    y = y + b2_ref[...]                  # (Bt, N, H2)

    # ---- L2 normalize along feature dim; single fused rsqrt.
    #      eps is squared (1e-24) to match torch's norm.clamp_min(1e-12).
    sumsq = jnp.sum(y * y, axis=-1, keepdims=True)
    t = y * jax.lax.rsqrt(jnp.maximum(sumsq, 1e-24))

    # ---- cosine-similarity matrix on the MXU, batched over the Bt tile.
    corr = jax.lax.dot_general(
        t, t, (((2,), (2,)), ((0,), (0,))), preferred_element_type=jnp.float32
    )                                    # (Bt, N, N)

    # ---- straight-through hard threshold (forward only): corr > clamp(th).
    th = jnp.clip(th_ref[0], -0.9999, 0.9999)
    o_ref[...] = (corr > th).astype(o_ref.dtype)


def _pick_batch_tile(B, N, max_block_bytes=2 * 1024 * 1024):
    """Largest divisor of B whose (Bt, N, N) f32 output block stays <= ~2 MiB."""
    per_batch = max(1, N * N * 4)
    bt = max(1, min(B, max_block_bytes // per_batch))
    while B % bt != 0:
        bt -= 1
    return bt


def st_adaptive_group_estimator(x, w1, b1, alpha, w2, b2, th, *, out_dtype=jnp.float32):
    """x: (B, N, D) f32.  Returns G: (B, N, N) in `out_dtype` (values 0.0 / 1.0)."""
    B, N, D = x.shape
    H1 = w1.shape[1]   # 8
    H2 = w2.shape[1]   # 16
    Bt = _pick_batch_tile(B, N)

    grid_spec = pltpu.PrefetchScalarGridSpec(
        num_scalar_prefetch=0,
        grid=(B // Bt,),
        in_specs=[
            pl.BlockSpec((Bt, N, D), lambda i: (i, 0, 0)),          # x (Bt batches/step)
            pl.BlockSpec((D, H1), lambda i: (0, 0)),                # w1 (resident)
            pl.BlockSpec((1, H1), lambda i: (0, 0)),                # b1 (resident)
            pl.BlockSpec(memory_space=pltpu.MemorySpace.SMEM),      # prelu alpha (1,)
            pl.BlockSpec((H1, H2), lambda i: (0, 0)),               # w2 (resident)
            pl.BlockSpec((1, H2), lambda i: (0, 0)),                # b2 (resident)
            pl.BlockSpec(memory_space=pltpu.MemorySpace.SMEM),      # th (1,)
        ],
        out_specs=pl.BlockSpec((Bt, N, N), lambda i: (i, 0, 0)),
    )

    return pl.pallas_call(
        _group_kernel,
        out_shape=jax.ShapeDtypeStruct((B, N, N), out_dtype),
        grid_spec=grid_spec,
        compiler_params=pltpu.CompilerParams(dimension_semantics=("parallel",)),
    )(x, w1, b1, alpha, w2, b2, th)


def _reference(x, w1, b1, alpha, w2, b2, th):
    h = x @ w1 + b1[0]
    h = jnp.where(h >= 0, h, alpha[0] * h)
    y = h @ w2 + b2[0]
    norm = jnp.sqrt(jnp.sum(y * y, axis=-1, keepdims=True))
    t = y / jnp.maximum(norm, 1e-12)
    corr = jnp.einsum("bnd,bmd->bnm", t, t)
    thc = jnp.clip(th[0], -0.9999, 0.9999)
    return (corr - thc > 0).astype(jnp.float32)


if __name__ == "__main__":
    # Small shapes consistent with the module: in_dims=2, hidden=8, out=16.
    B, N, D = 2, 8, 2
    H1, H2 = 8, 16

    key = jax.random.PRNGKey(0)
    kx, kw1, kb1, kw2, kb2 = jax.random.split(key, 5)

    x = jax.random.normal(kx, (B, N, D), dtype=jnp.float32)

    # Deterministic synthetic parameter init (shapes from nn.Linear / nn.PReLU).
    w1 = jax.random.uniform(kw1, (D, H1), jnp.float32, -0.5, 0.5)
    b1 = jax.random.uniform(kb1, (1, H1), jnp.float32, -0.5, 0.5)
    alpha = jnp.array([0.25], dtype=jnp.float32)          # nn.PReLU() default slope
    w2 = jax.random.uniform(kw2, (H1, H2), jnp.float32, -0.35, 0.35)
    b2 = jax.random.uniform(kb2, (1, H2), jnp.float32, -0.35, 0.35)
    th = jnp.array([0.7], dtype=jnp.float32)              # module's self.th init

    G = st_adaptive_group_estimator(x, w1, b1, alpha, w2, b2, th)
    G = jax.block_until_ready(G)

    G_ref = _reference(x, w1, b1, alpha, w2, b2, th)
    assert G.shape == (B, N, N)
    assert jnp.allclose(G, G_ref), "Pallas kernel mismatch vs JAX reference"

    print("KERNEL_OK")
</pallas_src>

<mosaic_0001>
module attributes {stable_mosaic.version = 11 : i64} {
  func.func @_group_kernel(%arg0: i32, %arg1: memref<2x8x2xf32, #tpu.memory_space<vmem>>, %arg2: memref<2x8xf32, #tpu.memory_space<vmem>>, %arg3: memref<1x8xf32, #tpu.memory_space<vmem>>, %arg4: memref<1xf32, #tpu.memory_space<smem>>, %arg5: memref<8x16xf32, #tpu.memory_space<vmem>>, %arg6: memref<1x16xf32, #tpu.memory_space<vmem>>, %arg7: memref<1xf32, #tpu.memory_space<smem>>, %arg8: memref<2x8x8xf32, #tpu.memory_space<vmem>>) attributes {dimension_semantics = [#tpu.dimension_semantics<parallel>], iteration_bounds = array<i64: 1>, scalar_prefetch = 0 : i64, scratch_operands = 0 : i64, tpu.core_type = #tpu.core_type<tc>, window_params = [{transform_indices = @transform_0, window_bounds = array<i64: 2, 8, 2>}, {pipeline_mode = #tpu.pipeline_mode<synchronous>, transform_indices = @transform_1, window_bounds = array<i64: 2, 8>}, {pipeline_mode = #tpu.pipeline_mode<synchronous>, transform_indices = @transform_2, window_bounds = array<i64: 1, 8>}, {transform_indices = @transform_3, window_bounds = array<i64: 1>}, {pipeline_mode = #tpu.pipeline_mode<synchronous>, transform_indices = @transform_4, window_bounds = array<i64: 8, 16>}, {pipeline_mode = #tpu.pipeline_mode<synchronous>, transform_indices = @transform_5, window_bounds = array<i64: 1, 16>}, {transform_indices = @transform_6, window_bounds = array<i64: 1>}, {transform_indices = @transform_7, window_bounds = array<i64: 2, 8, 8>}]} {
    %c0 = arith.constant 0 : index
    %c0_0 = arith.constant 0 : index
    %c0_1 = arith.constant 0 : index
    %0 = vector.load %arg1[%c0, %c0_0, %c0_1] : memref<2x8x2xf32, #tpu.memory_space<vmem>>, vector<2x8x2xf32>
    %1 = vector.extract_strided_slice %0 {offsets = [0, 0, 0], sizes = [2, 8, 1], strides = [1, 1, 1]} : vector<2x8x2xf32> to vector<2x8x1xf32>
    %c0_2 = arith.constant 0 : index
    %c0_3 = arith.constant 0 : index
    %2 = vector.load %arg2[%c0_2, %c0_3] : memref<2x8xf32, #tpu.memory_space<vmem>>, vector<1x8xf32>
    %3 = vector.shape_cast %2 : vector<1x8xf32> to vector<1x1x8xf32>
    %4 = vector.broadcast %1 : vector<2x8x1xf32> to vector<2x8x8xf32>
    %5 = vector.broadcast %3 : vector<1x1x8xf32> to vector<2x8x8xf32>
    %6 = arith.mulf %4, %5 : vector<2x8x8xf32>
    %7 = vector.extract_strided_slice %0 {offsets = [0, 0, 1], sizes = [2, 8, 1], strides = [1, 1, 1]} : vector<2x8x2xf32> to vector<2x8x1xf32>
    %c1 = arith.constant 1 : index
    %c0_4 = arith.constant 0 : index
    %8 = vector.load %arg2[%c1, %c0_4] : memref<2x8xf32, #tpu.memory_space<vmem>>, vector<1x8xf32>
    %9 = vector.shape_cast %8 : vector<1x8xf32> to vector<1x1x8xf32>
    %10 = vector.broadcast %7 : vector<2x8x1xf32> to vector<2x8x8xf32>
    %11 = vector.broadcast %9 : vector<1x1x8xf32> to vector<2x8x8xf32>
    %12 = arith.mulf %10, %11 : vector<2x8x8xf32>
    %13 = arith.addf %6, %12 : vector<2x8x8xf32>
    %c0_5 = arith.constant 0 : index
    %c0_6 = arith.constant 0 : index
    %14 = vector.load %arg3[%c0_5, %c0_6] : memref<1x8xf32, #tpu.memory_space<vmem>>, vector<1x8xf32>
    %15 = vector.shape_cast %14 : vector<1x8xf32> to vector<1x1x8xf32>
    %16 = vector.broadcast %15 : vector<1x1x8xf32> to vector<2x8x8xf32>
    %17 = arith.addf %13, %16 : vector<2x8x8xf32>
    %c0_7 = arith.constant 0 : index
    %18 = memref.load %arg4[%c0_7] : memref<1xf32, #tpu.memory_space<smem>>
    %cst = arith.constant 0.000000e+00 : f32
    %19 = vector.broadcast %cst : f32 to vector<2x8x8xf32>
    %20 = arith.cmpf oge, %17, %19 : vector<2x8x8xf32>
    %21 = vector.broadcast %18 : f32 to vector<2x8x8xf32>
    %22 = arith.mulf %21, %17 : vector<2x8x8xf32>
    %23 = arith.select %20, %17, %22 : vector<2x8x8xi1>, vector<2x8x8xf32>
    %24 = vector.extract_strided_slice %23 {offsets = [0, 0, 0], sizes = [2, 8, 1], strides = [1, 1, 1]} : vector<2x8x8xf32> to vector<2x8x1xf32>
    %c0_8 = arith.constant 0 : index
    %c0_9 = arith.constant 0 : index
    %25 = vector.load %arg5[%c0_8, %c0_9] : memref<8x16xf32, #tpu.memory_space<vmem>>, vector<1x16xf32>
    %26 = vector.shape_cast %25 : vector<1x16xf32> to vector<1x1x16xf32>
    %27 = vector.broadcast %24 : vector<2x8x1xf32> to vector<2x8x16xf32>
    %28 = vector.broadcast %26 : vector<1x1x16xf32> to vector<2x8x16xf32>
    %29 = arith.mulf %27, %28 : vector<2x8x16xf32>
    %30 = vector.extract_strided_slice %23 {offsets = [0, 0, 1], sizes = [2, 8, 1], strides = [1, 1, 1]} : vector<2x8x8xf32> to vector<2x8x1xf32>
    %c1_10 = arith.constant 1 : index
    %c0_11 = arith.constant 0 : index
    %31 = vector.load %arg5[%c1_10, %c0_11] : memref<8x16xf32, #tpu.memory_space<vmem>>, vector<1x16xf32>
    %32 = vector.shape_cast %31 : vector<1x16xf32> to vector<1x1x16xf32>
    %33 = vector.broadcast %30 : vector<2x8x1xf32> to vector<2x8x16xf32>
    %34 = vector.broadcast %32 : vector<1x1x16xf32> to vector<2x8x16xf32>
    %35 = arith.mulf %33, %34 : vector<2x8x16xf32>
    %36 = arith.addf %29, %35 : vector<2x8x16xf32>
    %37 = vector.extract_strided_slice %23 {offsets = [0, 0, 2], sizes = [2, 8, 1], strides = [1, 1, 1]} : vector<2x8x8xf32> to vector<2x8x1xf32>
    %c2 = arith.constant 2 : index
    %c0_12 = arith.constant 0 : index
    %38 = vector.load %arg5[%c2, %c0_12] : memref<8x16xf32, #tpu.memory_space<vmem>>, vector<1x16xf32>
    %39 = vector.shape_cast %38 : vector<1x16xf32> to vector<1x1x16xf32>
    %40 = vector.broadcast %37 : vector<2x8x1xf32> to vector<2x8x16xf32>
    %41 = vector.broadcast %39 : vector<1x1x16xf32> to vector<2x8x16xf32>
    %42 = arith.mulf %40, %41 : vector<2x8x16xf32>
    %43 = arith.addf %36, %42 : vector<2x8x16xf32>
    %44 = vector.extract_strided_slice %23 {offsets = [0, 0, 3], sizes = [2, 8, 1], strides = [1, 1, 1]} : vector<2x8x8xf32> to vector<2x8x1xf32>
    %c3 = arith.constant 3 : index
    %c0_13 = arith.constant 0 : index
    %45 = vector.load %arg5[%c3, %c0_13] : memref<8x16xf32, #tpu.memory_space<vmem>>, vector<1x16xf32>
    %46 = vector.shape_cast %45 : vector<1x16xf32> to vector<1x1x16xf32>
    %47 = vector.broadcast %44 : vector<2x8x1xf32> to vector<2x8x16xf32>
    %48 = vector.broadcast %46 : vector<1x1x16xf32> to vector<2x8x16xf32>
    %49 = arith.mulf %47, %48 : vector<2x8x16xf32>
    %50 = arith.addf %43, %49 : vector<2x8x16xf32>
    %51 = vector.extract_strided_slice %23 {offsets = [0, 0, 4], sizes = [2, 8, 1], strides = [1, 1, 1]} : vector<2x8x8xf32> to vector<2x8x1xf32>
    %c4 = arith.constant 4 : index
    %c0_14 = arith.constant 0 : index
    %52 = vector.load %arg5[%c4, %c0_14] : memref<8x16xf32, #tpu.memory_space<vmem>>, vector<1x16xf32>
    %53 = vector.shape_cast %52 : vector<1x16xf32> to vector<1x1x16xf32>
    %54 = vector.broadcast %51 : vector<2x8x1xf32> to vector<2x8x16xf32>
    %55 = vector.broadcast %53 : vector<1x1x16xf32> to vector<2x8x16xf32>
    %56 = arith.mulf %54, %55 : vector<2x8x16xf32>
    %57 = arith.addf %50, %56 : vector<2x8x16xf32>
    %58 = vector.extract_strided_slice %23 {offsets = [0, 0, 5], sizes = [2, 8, 1], strides = [1, 1, 1]} : vector<2x8x8xf32> to vector<2x8x1xf32>
    %c5 = arith.constant 5 : index
    %c0_15 = arith.constant 0 : index
    %59 = vector.load %arg5[%c5, %c0_15] : memref<8x16xf32, #tpu.memory_space<vmem>>, vector<1x16xf32>
    %60 = vector.shape_cast %59 : vector<1x16xf32> to vector<1x1x16xf32>
    %61 = vector.broadcast %58 : vector<2x8x1xf32> to vector<2x8x16xf32>
    %62 = vector.broadcast %60 : vector<1x1x16xf32> to vector<2x8x16xf32>
    %63 = arith.mulf %61, %62 : vector<2x8x16xf32>
    %64 = arith.addf %57, %63 : vector<2x8x16xf32>
    %65 = vector.extract_strided_slice %23 {offsets = [0, 0, 6], sizes = [2, 8, 1], strides = [1, 1, 1]} : vector<2x8x8xf32> to vector<2x8x1xf32>
    %c6 = arith.constant 6 : index
    %c0_16 = arith.constant 0 : index
    %66 = vector.load %arg5[%c6, %c0_16] : memref<8x16xf32, #tpu.memory_space<vmem>>, vector<1x16xf32>
    %67 = vector.shape_cast %66 : vector<1x16xf32> to vector<1x1x16xf32>
    %68 = vector.broadcast %65 : vector<2x8x1xf32> to vector<2x8x16xf32>
    %69 = vector.broadcast %67 : vector<1x1x16xf32> to vector<2x8x16xf32>
    %70 = arith.mulf %68, %69 : vector<2x8x16xf32>
    %71 = arith.addf %64, %70 : vector<2x8x16xf32>
    %72 = vector.extract_strided_slice %23 {offsets = [0, 0, 7], sizes = [2, 8, 1], strides = [1, 1, 1]} : vector<2x8x8xf32> to vector<2x8x1xf32>
    %c7 = arith.constant 7 : index
    %c0_17 = arith.constant 0 : index
    %73 = vector.load %arg5[%c7, %c0_17] : memref<8x16xf32, #tpu.memory_space<vmem>>, vector<1x16xf32>
    %74 = vector.shape_cast %73 : vector<1x16xf32> to vector<1x1x16xf32>
    %75 = vector.broadcast %72 : vector<2x8x1xf32> to vector<2x8x16xf32>
    %76 = vector.broadcast %74 : vector<1x1x16xf32> to vector<2x8x16xf32>
    %77 = arith.mulf %75, %76 : vector<2x8x16xf32>
    %78 = arith.addf %71, %77 : vector<2x8x16xf32>
    %c0_18 = arith.constant 0 : index
    %c0_19 = arith.constant 0 : index
    %79 = vector.load %arg6[%c0_18, %c0_19] : memref<1x16xf32, #tpu.memory_space<vmem>>, vector<1x16xf32>
    %80 = vector.shape_cast %79 : vector<1x16xf32> to vector<1x1x16xf32>
    %81 = vector.broadcast %80 : vector<1x1x16xf32> to vector<2x8x16xf32>
    %82 = arith.addf %78, %81 : vector<2x8x16xf32>
    %83 = arith.mulf %82, %82 : vector<2x8x16xf32>
    %cst_20 = arith.constant dense<0.000000e+00> : vector<2x8xf32>
    %84 = vector.multi_reduction <add>, %83, %cst_20 [2] : vector<2x8x16xf32> to vector<2x8xf32>
    %85 = vector.shape_cast %84 : vector<2x8xf32> to vector<2x8x1xf32>
    %cst_21 = arith.constant 1.000000e-24 : f32
    %86 = vector.broadcast %cst_21 : f32 to vector<2x8x1xf32>
    %87 = arith.maximumf %85, %86 : vector<2x8x1xf32>
    %88 = math.rsqrt %87 : vector<2x8x1xf32>
    %89 = vector.broadcast %88 : vector<2x8x1xf32> to vector<2x8x16xf32>
    %90 = arith.mulf %82, %89 : vector<2x8x16xf32>
    %cst_22 = arith.constant dense<0.000000e+00> : vector<2x8x8xf32>
    %91 = tpu.matmul %90, %90, %cst_22 {dimension_numbers = #tpu.dot_dimension_numbers<[2], [2], [1], [1], [0, 0, 0, 1, 1, 1], [0], [0]>} : vector<2x8x16xf32>, vector<2x8x16xf32>, vector<2x8x8xf32> -> vector<2x8x8xf32>
    %c0_23 = arith.constant 0 : index
    %92 = memref.load %arg7[%c0_23] : memref<1xf32, #tpu.memory_space<smem>>
    %cst_24 = arith.constant -0.999899983 : f32
    %cst_25 = arith.constant 0.999899983 : f32
    %93 = arith.maximumf %cst_24, %92 : f32
    %94 = arith.minimumf %cst_25, %93 : f32
    %95 = vector.broadcast %94 : f32 to vector<2x8x8xf32>
    %96 = arith.cmpf ogt, %91, %95 : vector<2x8x8xf32>
    %97 = arith.extui %96 : vector<2x8x8xi1> to vector<2x8x8xi32>
    %98 = arith.sitofp %97 : vector<2x8x8xi32> to vector<2x8x8xf32>
    %c0_26 = arith.constant 0 : index
    %c0_27 = arith.constant 0 : index
    %c0_28 = arith.constant 0 : index
    %99 = vector.load %arg8[%c0_26, %c0_27, %c0_28] : memref<2x8x8xf32, #tpu.memory_space<vmem>>, vector<2x8x8xf32>
    tpu.vector_store %arg8[%c0_26, %c0_27, %c0_28], %98 {strides = array<i32>} : memref<2x8x8xf32, #tpu.memory_space<vmem>>, vector<2x8x8xf32>,
    return
  }
  func.func @transform_0(%arg0: i32) -> (i32, i32, i32) {
    %c0_i32 = arith.constant 0 : i32
    %c0_i32_0 = arith.constant 0 : i32
    %c0_i32_1 = arith.constant 0 : i32
    return %arg0, %c0_i32, %c0_i32_0 : i32, i32, i32
  }
  func.func @transform_1(%arg0: i32) -> (i32, i32) {
    %c0_i32 = arith.constant 0 : i32
    %c0_i32_0 = arith.constant 0 : i32
    %c0_i32_1 = arith.constant 0 : i32
    return %c0_i32, %c0_i32_0 : i32, i32
  }
  func.func @transform_2(%arg0: i32) -> (i32, i32) {
    %c0_i32 = arith.constant 0 : i32
    %c0_i32_0 = arith.constant 0 : i32
    %c0_i32_1 = arith.constant 0 : i32
    return %c0_i32, %c0_i32_0 : i32, i32
  }
  func.func @transform_3(%arg0: i32) -> i32 {
    %c0_i32 = arith.constant 0 : i32
    %c0_i32_0 = arith.constant 0 : i32
    return %c0_i32 : i32
  }
  func.func @transform_4(%arg0: i32) -> (i32, i32) {
    %c0_i32 = arith.constant 0 : i32
    %c0_i32_0 = arith.constant 0 : i32
    %c0_i32_1 = arith.constant 0 : i32
    return %c0_i32, %c0_i32_0 : i32, i32
  }
  func.func @transform_5(%arg0: i32) -> (i32, i32) {
    %c0_i32 = arith.constant 0 : i32
    %c0_i32_0 = arith.constant 0 : i32
    %c0_i32_1 = arith.constant 0 : i32
    return %c0_i32, %c0_i32_0 : i32, i32
  }
  func.func @transform_6(%arg0: i32) -> i32 {
    %c0_i32 = arith.constant 0 : i32
    %c0_i32_0 = arith.constant 0 : i32
    return %c0_i32 : i32
  }
  func.func @transform_7(%arg0: i32) -> (i32, i32, i32) {
    %c0_i32 = arith.constant 0 : i32
    %c0_i32_0 = arith.constant 0 : i32
    %c0_i32_1 = arith.constant 0 : i32
    return %arg0, %c0_i32, %c0_i32_0 : i32, i32, i32
  }
}

</mosaic_0001>

<llo_original>
// kernel: tpu_custom_call.1
$region0: #{tpu_custom_call.1}
  #allocation0 [shape = 'u32[]', space=smem, size = 0x4, offset = 0x4, fixed_abs, tag = 'smem constant byte address 0x4 - core index']
  #allocation1 [shape = 'u32[72,128]{1,0:T(1,128)}', space=vmem, size = 0x9000, scoped, tag = 'internal scratch']
  #allocation2 [shape = 'f32[1]{0:T(128)S(6)}', space=smem, size = 0x200, scoped, tag = 'scoped memory for tpu_custom_call.1']
  #allocation3 [shape = 'f32[1]{0:T(128)S(6)}', space=smem, size = 0x200, scoped, tag = 'scoped memory for tpu_custom_call.1']
  %s0 = inlined_call_operand.vmem [shape: f32[2,8,2], index: 0, kind: input, shape index: {}]
  %s1 = inlined_call_operand.vmem [shape: f32[2,8], index: 1, kind: input, shape index: {}]
  %s2 = inlined_call_operand.vmem [shape: f32[1,8], index: 2, kind: input, shape index: {}]
  %s3 = inlined_call_operand.<no memory space> [shape: f32[1], index: 3, kind: input, shape index: {}]
  %s4 = inlined_call_operand.vmem [shape: f32[8,16], index: 4, kind: input, shape index: {}]
  %s5 = inlined_call_operand.vmem [shape: f32[1,16], index: 5, kind: input, shape index: {}]
  %s6 = inlined_call_operand.<no memory space> [shape: f32[1], index: 6, kind: input, shape index: {}]
  %s7 = inlined_call_operand.hbm [shape: f32[2,8,8], index: 7, kind: output, shape index: {}]
  %s8 = sld [smem:[#allocation0]]
  $region38: #{tpu_custom_call.1} parent=0
    _
  %s10 = ssub.s32 1, %s8
  %s11 = scalar_select 0, %s10, %s8
  %12 = sst [smem:[#allocation2]] %s3
  %13 = sst [smem:[#allocation3]] %s6
  $region1: #{tpu_custom_call.1} parent=0
    #allocation4 [shape = 'u8[8192]{0}', space=vmem, size = 0x2000, scoped, tag = 'output window, operand 0, single buffered']
    #allocation5 [shape = 's32[1]{0}', space=sflag, size = 0x4, scoped, tag = 'scoped memory for tpu_custom_call.1']
    %14 = vsyncpa [#allocation5], 0
    // Predicated region
    $region2: #{tpu_custom_call.1} parent=1 // pred_check
      _
    $region3: #{tpu_custom_call.1} parent=1 // pred_check_branch
      %16 = sbr.rel (0) target = $region5
    $region4: #{tpu_custom_call.1} parent=1 // pred_region
      _
    $region5: #{tpu_custom_call.1} parent=1 // pred_fallthru
      _
    // Predicated region
    $region6: #{tpu_custom_call.1} parent=1 // pred_check
      _
    $region7: #{tpu_custom_call.1} parent=1 // pred_check_branch
      %18 = sbr.rel (0) target = $region9
    $region8: #{tpu_custom_call.1} parent=1 // pred_region
      _
    $region9: #{tpu_custom_call.1} parent=1 // pred_fallthru
      _
    // Predicated region
    $region10: #{tpu_custom_call.1} parent=1 // pred_check
      _
    $region11: #{tpu_custom_call.1} parent=1 // pred_check_branch
      %20 = sbr.rel (0) target = $region13
    $region12: #{tpu_custom_call.1} parent=1 // pred_region
      _
    $region13: #{tpu_custom_call.1} parent=1 // pred_fallthru
      _
    // Predicated region
    $region14: #{tpu_custom_call.1} parent=1 // pred_check
      _
    $region15: #{tpu_custom_call.1} parent=1 // pred_check_branch
      %22 = sbr.rel (0) target = $region17
    $region16: #{tpu_custom_call.1} parent=1 // pred_region
      _
    $region17: #{tpu_custom_call.1} parent=1 // pred_fallthru
      _
    // Predicated region
    $region18: #{tpu_custom_call.1} parent=1 // pred_check
      _
    $region19: #{tpu_custom_call.1} parent=1 // pred_check_branch
      %24 = sbr.rel (0) target = $region21
    $region20: #{tpu_custom_call.1} parent=1 // pred_region
      _
    $region21: #{tpu_custom_call.1} parent=1 // pred_fallthru
      _
    // Predicated region
    $region22: #{tpu_custom_call.1} parent=1 // pred_check
      _
    $region23: #{tpu_custom_call.1} parent=1 // pred_check_branch
      %26 = sbr.rel (0) target = $region25
    $region24: #{tpu_custom_call.1} parent=1 // pred_region
      _
    $region25: #{tpu_custom_call.1} parent=1 // pred_fallthru
      _
    // Predicated region
    $region26: #{tpu_custom_call.1} parent=1 // pred_check
      _
    $region27: #{tpu_custom_call.1} parent=1 // pred_check_branch
      %28 = sbr.rel (0) target = $region29
    $region28: #{tpu_custom_call.1} parent=1 // pred_region
      _
    $region29: #{tpu_custom_call.1} parent=1 // pred_fallthru
      _
    %v29 = vld [vmem:[%s0] sm:$0xff]
    %v30 = vld [vmem:[%s0 + $0x8] sm:$0xff]
    %v31 = vld [vmem:[%s1] sm:$0x1]
    %33 = vset.pattern.permute.xlu0 0
    %34 = vperm.xlu0 %33, %v29
    %v35 = vpop.permute.xlu0 %34
    %38 = vset.pattern.permute.xlu0 0
    %39 = vperm.xlu0 %38, %v30
    %v40 = vpop.permute.xlu0 %39
    %v42 = vperm.slane %v31, 0
    %v43 = vmul.f32 %v35, %v42
    %v44 = vmul.f32 %v40, %v42
    %v45 = vld [vmem:[%s1 + $0x1] sm:$0x1]
    %46 = vset.pattern.permute.xlu0 1
    %47 = vperm.xlu0 %46, %v29
    %v48 = vpop.permute.xlu0 %47
    %50 = vset.pattern.permute.xlu0 1
    %51 = vperm.xlu0 %50, %v30
    %v52 = vpop.permute.xlu0 %51
    %v54 = vperm.slane %v45, 0
    %v55 = vmul.f32 %v48, %v54
    %v56 = vmul.f32 %v52, %v54
    %v57 = vadd.f32 %v43, %v55
    %v58 = vadd.f32 %v44, %v56
    %v59 = vld [vmem:[%s2] sm:$0x1]
    %v61 = vperm.slane %v59, 0
    %v63 = vadd.f32 %v57, %v61
    %v64 = vadd.f32 %v58, %v61
    %s65 = sld [smem:[#allocation2]]
    %vm66 = vcmp.ge.f32.partialorder %v63, 0.0
    %vm67 = vcmp.ge.f32.partialorder %v64, 0.0
    %v68 = vstv %s65
    %v69 = vmul.f32 %v68, %v63
    %v70 = vmul.f32 %v68, %v64
    %v71 = vsel %vm66, %v63, %v69
    %v72 = vsel %vm67, %v64, %v70
    %v73 = vld [vmem:[%s4] sm:$0x1]
    %75 = vset.pattern.permute.xlu0 0
    %76 = vperm.xlu0 %75, %v71
    %v77 = vpop.permute.xlu0 %76
    %80 = vset.pattern.permute.xlu0 0
    %81 = vperm.xlu0 %80, %v72
    %v82 = vpop.permute.xlu0 %81
    %v84 = vperm.slane %v73, 0
    %v85 = vmul.f32 %v77, %v84
    %v86 = vmul.f32 %v82, %v84
    %v87 = vld [vmem:[%s4 + $0x1] sm:$0x1]
    %88 = vset.pattern.permute.xlu0 1
    %89 = vperm.xlu0 %88, %v71
    %v90 = vpop.permute.xlu0 %89
    %92 = vset.pattern.permute.xlu0 1
    %93 = vperm.xlu0 %92, %v72
    %v94 = vpop.permute.xlu0 %93
    %v96 = vperm.slane %v87, 0
    %v97 = vmul.f32 %v90, %v96
    %v98 = vmul.f32 %v94, %v96
    %v99 = vadd.f32 %v85, %v97
    %v100 = vadd.f32 %v86, %v98
    %v101 = vld [vmem:[%s4 + $0x2] sm:$0x1]
    %102 = vset.pattern.permute.xlu0 2
    %103 = vperm.xlu0 %102, %v71
    %v104 = vpop.permute.xlu0 %103
    %106 = vset.pattern.permute.xlu0 2
    %107 = vperm.xlu0 %106, %v72
    %v108 = vpop.permute.xlu0 %107
    %v110 = vperm.slane %v101, 0
    %v111 = vmul.f32 %v104, %v110
    %v112 = vmul.f32 %v108, %v110
    %v113 = vadd.f32 %v99, %v111
    %v114 = vadd.f32 %v100, %v112
    %v115 = vld [vmem:[%s4 + $0x3] sm:$0x1]
    %116 = vset.pattern.permute.xlu0 3
    %117 = vperm.xlu0 %116, %v71
    %v118 = vpop.permute.xlu0 %117
    %120 = vset.pattern.permute.xlu0 3
    %121 = vperm.xlu0 %120, %v72
    %v122 = vpop.permute.xlu0 %121
    %v124 = vperm.slane %v115, 0
    %v125 = vmul.f32 %v118, %v124
    %v126 = vmul.f32 %v122, %v124
    %v127 = vadd.f32 %v113, %v125
    %v128 = vadd.f32 %v114, %v126
    %v129 = vld [vmem:[%s4 + $0x4] sm:$0x1]
    %130 = vset.pattern.permute.xlu0 4
    %131 = vperm.xlu0 %130, %v71
    %v132 = vpop.permute.xlu0 %131
    %134 = vset.pattern.permute.xlu0 4
    %135 = vperm.xlu0 %134, %v72
    %v136 = vpop.permute.xlu0 %135
    %v138 = vperm.slane %v129, 0
    %v139 = vmul.f32 %v132, %v138
    %v140 = vmul.f32 %v136, %v138
    %v141 = vadd.f32 %v127, %v139
    %v142 = vadd.f32 %v128, %v140
    %v143 = vld [vmem:[%s4 + $0x5] sm:$0x1]
    %144 = vset.pattern.permute.xlu0 5
    %145 = vperm.xlu0 %144, %v71
    %v146 = vpop.permute.xlu0 %145
    %148 = vset.pattern.permute.xlu0 5
    %149 = vperm.xlu0 %148, %v72
    %v150 = vpop.permute.xlu0 %149
    %v152 = vperm.slane %v143, 0
    %v153 = vmul.f32 %v146, %v152
    %v154 = vmul.f32 %v150, %v152
    %v155 = vadd.f32 %v141, %v153
    %v156 = vadd.f32 %v142, %v154
    %v157 = vld [vmem:[%s4 + $0x6] sm:$0x1]
    %158 = vset.pattern.permute.xlu0 6
    %159 = vperm.xlu0 %158, %v71
    %v160 = vpop.permute.xlu0 %159
    %162 = vset.pattern.permute.xlu0 6
    %163 = vperm.xlu0 %162, %v72
    %v164 = vpop.permute.xlu0 %163
    %v166 = vperm.slane %v157, 0
    %v167 = vmul.f32 %v160, %v166
    %v168 = vmul.f32 %v164, %v166
    %v169 = vadd.f32 %v155, %v167
    %v170 = vadd.f32 %v156, %v168
    %v171 = vld [vmem:[%s4 + $0x7] sm:$0x1]
    %172 = vset.pattern.permute.xlu0 7
    %173 = vperm.xlu0 %172, %v71
    %v174 = vpop.permute.xlu0 %173
    %176 = vset.pattern.permute.xlu0 7
    %177 = vperm.xlu0 %176, %v72
    %v178 = vpop.permute.xlu0 %177
    %v180 = vperm.slane %v171, 0
    %v181 = vmul.f32 %v174, %v180
    %v182 = vmul.f32 %v178, %v180
    %v183 = vadd.f32 %v169, %v181
    %v184 = vadd.f32 %v170, %v182
    %v185 = vld [vmem:[%s5] sm:$0x1]
    %v187 = vperm.slane %v185, 0
    %v189 = vadd.f32 %v183, %v187
    %v190 = vadd.f32 %v184, %v187
    %v191 = vmul.f32 %v189, %v189
    %v192 = vmul.f32 %v190, %v190
    %vm193 = vcmask 130048
    %v194 = vsel %vm193, %v191, 0.0
    %195 = vadd.xlane.f32.xlu0 %v194
    %v196 = vpop.xlane.xlu0 %195
    %v197 = vsel %vm193, %v192, 0.0
    %198 = vadd.xlane.f32.xlu0 %v197
    %v199 = vpop.xlane.xlu0 %198
    %v200 = vmax.f32 %v196, 1e-24
    %v201 = vmax.f32 %v199, 1e-24
    %v202 = vrsqrt.pop %v200
    %v203 = vmul.f32 %v202, %v200
    %v204 = vmul.f32 %v203, %v202
    %v205 = vmul.f32 0.5, %v204
    %v206 = vsub.f32 1.5, %v205
    %v207 = vmul.f32 %v202, %v206
    %vm208 = vweird.f32 %v200
    %vm209 = vweird.f32 %v202
    %vm210 = vmor %vm208, %vm209
    %v211 = vsel %vm210, %v202, %v207
    %v212 = vrsqrt.pop %v201
    %v213 = vmul.f32 %v212, %v201
    %v214 = vmul.f32 %v213, %v212
    %v215 = vmul.f32 0.5, %v214
    %v216 = vsub.f32 1.5, %v215
    %v217 = vmul.f32 %v212, %v216
    %vm218 = vweird.f32 %v201
    %vm219 = vweird.f32 %v212
    %vm220 = vmor %vm218, %vm219
    %v221 = vsel %vm220, %v212, %v217
    %v222 = vmul.f32 %v189, %v211
    %v223 = vmul.f32 %v190, %v221
    %v225 = vsel %vm193, %v222, 0
    %227 = vmatpush.xpose.msra.mxu0 0.0
    %228 = vmatpush.xpose.msra.mxu0 0.0
    %229 = vmatpush.xpose.msra.mxu0 0.0
    %230 = vmatpush.xpose.msra.mxu0 0.0
    %231 = vmatpush.xpose.msra.mxu0 0.0
    %232 = vmatpush.xpose.msra.mxu0 0.0
    %233 = vmatpush.xpose.msra.mxu0 0.0
    %234 = vmatpush.xpose.msra.mxu0 0.0
    %235 = vmatpush.xpose.msra.mxu0 0.0
    %236 = vmatpush.xpose.msra.mxu0 0.0
    %237 = vmatpush.xpose.msra.mxu0 0.0
    %238 = vmatpush.xpose.msra.mxu0 0.0
    %239 = vmatpush.xpose.msra.mxu0 0.0
    %240 = vmatpush.xpose.msra.mxu0 0.0
    %241 = vmatpush.xpose.msra.mxu0 0.0
    %242 = vmatpush.xpose.msra.mxu0 %v225
    %243 = vmatmul.f32.gmra.mxu0 %v225
    %v244 = vpop.f32.mrf.mxu0
    %v245 = vadd.f32 0.0, %v244
    %246 = vdwg.mxu0
    %v248 = vsel %vm193, %v223, 0
    %250 = vmatpush.xpose.msra.mxu0 0.0
    %251 = vmatpush.xpose.msra.mxu0 0.0
    %252 = vmatpush.xpose.msra.mxu0 0.0
    %253 = vmatpush.xpose.msra.mxu0 0.0
    %254 = vmatpush.xpose.msra.mxu0 0.0
    %255 = vmatpush.xpose.msra.mxu0 0.0
    %256 = vmatpush.xpose.msra.mxu0 0.0
    %257 = vmatpush.xpose.msra.mxu0 0.0
    %258 = vmatpush.xpose.msra.mxu0 0.0
    %259 = vmatpush.xpose.msra.mxu0 0.0
    %260 = vmatpush.xpose.msra.mxu0 0.0
    %261 = vmatpush.xpose.msra.mxu0 0.0
    %262 = vmatpush.xpose.msra.mxu0 0.0
    %263 = vmatpush.xpose.msra.mxu0 0.0
    %264 = vmatpush.xpose.msra.mxu0 0.0
    %265 = vmatpush.xpose.msra.mxu0 %v248
    %266 = vmatmul.f32.gmra.mxu0 %v248
    %v267 = vpop.f32.mrf.mxu0
    %v268 = vadd.f32 0.0, %v267
    %269 = vdwg.mxu0
    %s270 = sld [smem:[#allocation3]]
    %s271 = smax.f32 %s270, -0.9999
    %s272 = smin.f32 %s271, 0.9999
    %v273 = vstv %s272
    %vm274 = vcmp.gt.f32.partialorder %v245, %v273
    %vm275 = vcmp.gt.f32.partialorder %v268, %v273
    %v276 = vsel %vm274, 1, 0
    %v277 = vsel %vm275, 1, 0
    %v278 = vcvt.s32.f32 %v276
    %v279 = vcvt.s32.f32 %v277
    %vm280 = vcmask 64512
    %281 = vst.msk [vmem:[#allocation4] sm:$0xff] %vm280, %v278
    %282 = vst.msk [vmem:[#allocation4 + $0x8] sm:$0xff] %vm280, %v279
    // Predicated region
    $region30: #{tpu_custom_call.1} parent=1 // pred_check
      _
    $region31: #{tpu_custom_call.1} parent=1 // pred_check_branch
      %284 = sbr.rel (0) target = $region33
    $region32: #{tpu_custom_call.1} parent=1 // pred_region
      %286 = vsyncadd [#allocation5], 0
      %s287 = sshll.u32 [#allocation4], 4
      %s288 = int_to_ptr.vmem [resolvable:$true] %s287
      %s289 = sshll.u32 %s7, 4
      %s290 = int_to_ptr.hbm [resolvable:$true] %s289
      %295 = dma.vmem_to_hbm [thread:$0]  %s288, 256, %s290, [#allocation5], 128, 128, 8
    $region33: #{tpu_custom_call.1} parent=1 // pred_fallthru
      _
    // Predicated region
    $region34: #{tpu_custom_call.1} parent=1 // pred_check
      _
    $region35: #{tpu_custom_call.1} parent=1 // pred_check_branch
      %297 = sbr.rel (0) target = $region37
    $region36: #{tpu_custom_call.1} parent=1 // pred_region
      %299 = dma.done [#allocation5], 256
    $region37: #{tpu_custom_call.1} parent=1 // pred_fallthru
      _
    %300 = vsyncpa [#allocation5], 1

</llo_original>
